<compile_context>
chip_gen: v7x
topology: tpu7x:2x2x1
jax: 0.10.0
libtpu: 0.0.40
codegen_flags: <defaults>
</compile_context>

<pallas_src>
import math

import jax
import jax.numpy as jnp
from jax.experimental import pallas as pl
from jax.experimental.pallas import tpu as pltpu

INV_GAMMA = 1.0 / 2.33
_LANES = 128
_SUBLANES = 8


def _round_up(x: int, m: int) -> int:
    return ((x + m - 1) // m) * m


def _logdist_kernel(d2_ref, logd_ref, mins_ref, maxs_ref):
    # d2_ref/logd_ref: (TR, 128); mins_ref/maxs_ref: (8, 128) per-tile partials.
    # logd = log(clamp(sqrt(d2), 0.01, inf)) == 0.5 * log(max(d2, 1e-4)); no sqrt.
    x = 0.5 * jnp.log(jnp.maximum(d2_ref[...], 1e-4))
    logd_ref[...] = x
    # Per-tile partial min/max (sublane reduce on the XLU).  Padded pixels were
    # filled with a real pixel's value in the wrapper, so no masking is needed.
    mins_ref[...] = jnp.broadcast_to(
        jnp.min(x, axis=0, keepdims=True), (_SUBLANES, _LANES))
    maxs_ref[...] = jnp.broadcast_to(
        jnp.max(x, axis=0, keepdims=True), (_SUBLANES, _LANES))


def _normalize_kernel(scale_ref, logd_ref, out_ref):
    # scale_ref (SMEM f32[2]): [lo, 1/(hi - lo)] -- reciprocal hoisted to JAX.
    lo = scale_ref[0]
    inv = scale_ref[1]
    x = (logd_ref[...] - lo) * inv                       # in [0, 1] for valid lanes
    # x ** (1/2.33) via exp/log on the EUP; x == 0 -> ~1e-13 (~= reference's 0).
    out_ref[...] = jnp.exp(jnp.log(jnp.maximum(x, 1e-30)) * INV_GAMMA)


def distance_shader(px_coords, surface_coords, *, max_tile_rows=4096):
    """Pallas implementation of DistanceShader.forward.

    px_coords, surface_coords: (..., 3) -> returns (..., 1) float32.
    """
    f32 = jnp.float32
    batch_shape = px_coords.shape[:-1]
    P = int(math.prod(batch_shape))

    # One fused XLA elementwise op: reads px/sc once, writes 4 B/pixel.
    diff = (px_coords.reshape(P, 3).astype(f32)
            - surface_coords.reshape(P, 3).astype(f32))
    d2 = jnp.sum(diff * diff, axis=-1)                   # (P,)

    # Sublane/lane-dense layout: pixels -> (rows, 128), tiled by TR rows.
    rows_needed = -(-P // _LANES)
    tr = min(max_tile_rows, _round_up(rows_needed, _SUBLANES))
    if rows_needed > 2 * _SUBLANES and _round_up(rows_needed, tr) == tr:
        # One tile would cover the whole image: split in two so the "parallel"
        # grid axis can shard across both TensorCores on v7x.
        tr = _round_up(-(-rows_needed // 2), _SUBLANES)
    rows_pad = _round_up(rows_needed, tr)
    num_tiles = rows_pad // tr
    p_pad = rows_pad * _LANES

    pad = p_pad - P
    if pad:
        # Pad with a real pixel's value so padding never perturbs min/max.
        d2 = jnp.concatenate([d2, jnp.broadcast_to(d2[0], (pad,))])
    d2 = d2.reshape(rows_pad, _LANES)

    cparams = pltpu.CompilerParams(
        dimension_semantics=("parallel",),                # both TCs on v7x
        vmem_limit_bytes=32 * 1024 * 1024,
    )

    # ---- Pass 1: logd + per-tile min/max partials, tiled over pixel rows ----
    logd, mins, maxs = pl.pallas_call(
        _logdist_kernel,
        out_shape=(
            jax.ShapeDtypeStruct((rows_pad, _LANES), f32),
            jax.ShapeDtypeStruct((num_tiles * _SUBLANES, _LANES), f32),
            jax.ShapeDtypeStruct((num_tiles * _SUBLANES, _LANES), f32),
        ),
        grid=(num_tiles,),
        in_specs=[pl.BlockSpec((tr, _LANES), lambda i: (i, 0))],
        out_specs=(
            pl.BlockSpec((tr, _LANES), lambda i: (i, 0)),
            pl.BlockSpec((_SUBLANES, _LANES), lambda i: (i, 0)),
            pl.BlockSpec((_SUBLANES, _LANES), lambda i: (i, 0)),
        ),
        compiler_params=cparams,
    )(d2)

    # ---- Global reduction over O(num_tiles) partials (tiny, no full re-read) --
    lo = jnp.min(mins)
    hi = jnp.max(maxs)
    inv = 1.0 / (hi - lo)   # hi == lo -> inf, matching the reference's div-by-zero
    scale = jnp.stack([lo, inv]).astype(f32)              # f32[2] -> SMEM

    # ---- Pass 2: normalise + gamma, scalars via SMEM --------------------------
    shaded = pl.pallas_call(
        _normalize_kernel,
        out_shape=jax.ShapeDtypeStruct((rows_pad, _LANES), f32),
        grid=(num_tiles,),
        in_specs=[
            pl.BlockSpec(memory_space=pltpu.MemorySpace.SMEM),   # [lo, inv]
            pl.BlockSpec((tr, _LANES), lambda i: (i, 0)),
        ],
        out_specs=pl.BlockSpec((tr, _LANES), lambda i: (i, 0)),
        compiler_params=cparams,
    )(scale, logd)

    return shaded.reshape(p_pad)[:P].reshape(batch_shape + (1,))


if __name__ == "__main__":
    import numpy as np

    key = jax.random.PRNGKey(0)

    def reference(px, sc):
        d = jnp.linalg.norm(px - sc, axis=-1, keepdims=True)
        logd = jnp.log(jnp.clip(d, 0.01, None))
        return jnp.power((logd - logd.min()) / (logd.max() - logd.min()), INV_GAMMA)

    # Small single-tile case and a multi-tile case that exercises pixel padding.
    for idx, shape in enumerate([(2, 16, 16), (1, 40, 200)]):
        k1, k2 = jax.random.split(jax.random.fold_in(key, idx))
        px_coords = jax.random.normal(k1, shape + (3,), jnp.float32)
        surface_coords = jax.random.normal(k2, shape + (3,), jnp.float32)

        out = jax.block_until_ready(distance_shader(px_coords, surface_coords))
        assert out.shape == shape + (1,)

        ref = reference(px_coords, surface_coords)
        np.testing.assert_allclose(np.asarray(out), np.asarray(ref),
                                   atol=1e-4, rtol=1e-3)

    print("KERNEL_OK")
</pallas_src>

<mosaic_0001>
module attributes {stable_mosaic.version = 11 : i64} {
  func.func @_logdist_kernel(%arg0: i32, %arg1: memref<8x128xf32, #tpu.memory_space<vmem>>, %arg2: memref<8x128xf32, #tpu.memory_space<vmem>>, %arg3: memref<8x128xf32, #tpu.memory_space<vmem>>, %arg4: memref<8x128xf32, #tpu.memory_space<vmem>>) attributes {dimension_semantics = [#tpu.dimension_semantics<parallel>], iteration_bounds = array<i64: 1>, scalar_prefetch = 0 : i64, scratch_operands = 0 : i64, tpu.core_type = #tpu.core_type<tc>, window_params = [{transform_indices = @transform_0, window_bounds = array<i64: 8, 128>}, {transform_indices = @transform_1, window_bounds = array<i64: 8, 128>}, {transform_indices = @transform_2, window_bounds = array<i64: 8, 128>}, {transform_indices = @transform_3, window_bounds = array<i64: 8, 128>}]} {
    %c0 = arith.constant 0 : index
    %c0_0 = arith.constant 0 : index
    %0 = vector.load %arg1[%c0, %c0_0] : memref<8x128xf32, #tpu.memory_space<vmem>>, vector<8x128xf32>
    %cst = arith.constant 9.99999974E-5 : f32
    %1 = vector.broadcast %cst : f32 to vector<8x128xf32>
    %2 = arith.maximumf %0, %1 : vector<8x128xf32>
    %3 = math.log %2 : vector<8x128xf32>
    %cst_1 = arith.constant 5.000000e-01 : f32
    %4 = vector.broadcast %cst_1 : f32 to vector<8x128xf32>
    %5 = arith.mulf %4, %3 : vector<8x128xf32>
    %c0_2 = arith.constant 0 : index
    %c0_3 = arith.constant 0 : index
    %6 = vector.load %arg2[%c0_2, %c0_3] : memref<8x128xf32, #tpu.memory_space<vmem>>, vector<8x128xf32>
    tpu.vector_store %arg2[%c0_2, %c0_3], %5 {strides = array<i32>} : memref<8x128xf32, #tpu.memory_space<vmem>>, vector<8x128xf32>,
    %cst_4 = arith.constant dense<0x7F800000> : vector<128xf32>
    %7 = vector.multi_reduction <minimumf>, %5, %cst_4 [0] : vector<8x128xf32> to vector<128xf32>
    %8 = vector.shape_cast %7 : vector<128xf32> to vector<1x128xf32>
    %9 = vector.shape_cast %8 : vector<1x128xf32> to vector<1x128xf32>
    %10 = vector.broadcast %9 : vector<1x128xf32> to vector<8x128xf32>
    %c0_5 = arith.constant 0 : index
    %c0_6 = arith.constant 0 : index
    %11 = vector.load %arg3[%c0_5, %c0_6] : memref<8x128xf32, #tpu.memory_space<vmem>>, vector<8x128xf32>
    tpu.vector_store %arg3[%c0_5, %c0_6], %10 {strides = array<i32>} : memref<8x128xf32, #tpu.memory_space<vmem>>, vector<8x128xf32>,
    %cst_7 = arith.constant dense<0xFF800000> : vector<128xf32>
    %12 = vector.multi_reduction <maximumf>, %5, %cst_7 [0] : vector<8x128xf32> to vector<128xf32>
    %13 = vector.shape_cast %12 : vector<128xf32> to vector<1x128xf32>
    %14 = vector.shape_cast %13 : vector<1x128xf32> to vector<1x128xf32>
    %15 = vector.broadcast %14 : vector<1x128xf32> to vector<8x128xf32>
    %c0_8 = arith.constant 0 : index
    %c0_9 = arith.constant 0 : index
    %16 = vector.load %arg4[%c0_8, %c0_9] : memref<8x128xf32, #tpu.memory_space<vmem>>, vector<8x128xf32>
    tpu.vector_store %arg4[%c0_8, %c0_9], %15 {strides = array<i32>} : memref<8x128xf32, #tpu.memory_space<vmem>>, vector<8x128xf32>,
    return
  }
  func.func @transform_0(%arg0: i32) -> (i32, i32) {
    %c0_i32 = arith.constant 0 : i32
    %c0_i32_0 = arith.constant 0 : i32
    return %arg0, %c0_i32 : i32, i32
  }
  func.func @transform_1(%arg0: i32) -> (i32, i32) {
    %c0_i32 = arith.constant 0 : i32
    %c0_i32_0 = arith.constant 0 : i32
    return %arg0, %c0_i32 : i32, i32
  }
  func.func @transform_2(%arg0: i32) -> (i32, i32) {
    %c0_i32 = arith.constant 0 : i32
    %c0_i32_0 = arith.constant 0 : i32
    return %arg0, %c0_i32 : i32, i32
  }
  func.func @transform_3(%arg0: i32) -> (i32, i32) {
    %c0_i32 = arith.constant 0 : i32
    %c0_i32_0 = arith.constant 0 : i32
    return %arg0, %c0_i32 : i32, i32
  }
}

</mosaic_0001>

<llo_original>
// kernel: tpu_custom_call.1
$region0: #{tpu_custom_call.1}
  #allocation0 [shape = 'u32[]', space=smem, size = 0x4, offset = 0x4, fixed_abs, tag = 'smem constant byte address 0x4 - core index']
  #allocation1 [shape = 'u32[144,128]{1,0:T(1,128)}', space=vmem, size = 0x12000, scoped, tag = 'internal scratch']
  %s0 = inlined_call_operand.hbm [shape: f32[8,128], index: 0, kind: input, shape index: {}]
  %s1 = inlined_call_operand.hbm [shape: f32[8,128], index: 1, kind: output, shape index: {0}]
  %s2 = inlined_call_operand.hbm [shape: f32[8,128], index: 2, kind: output, shape index: {1}]
  %s3 = inlined_call_operand.hbm [shape: f32[8,128], index: 3, kind: output, shape index: {2}]
  %4 = xla_tuple %s1, %s2, %s3
  %s5 = sld [smem:[#allocation0]]
  $region34: #{tpu_custom_call.1} parent=0
    _
  %s7 = ssub.s32 1, %s5
  %s8 = scalar_select 0, %s7, %s5
  $region1: #{tpu_custom_call.1} parent=0
    #allocation2 [shape = 'u8[4096]{0}', space=vmem, size = 0x1000, scoped, tag = 'input window, operand 0, single buffered']
    #allocation3 [shape = 's32[1]{0}', space=sflag, size = 0x4, scoped, tag = 'scoped memory for tpu_custom_call.1']
    #allocation4 [shape = 's32[1]{0}', space=sflag, size = 0x4, scoped, tag = 'scoped memory for tpu_custom_call.1']
    #allocation5 [shape = 'u8[4096]{0}', space=vmem, size = 0x1000, scoped, tag = 'output window, operand 0, single buffered']
    #allocation6 [shape = 'u8[4096]{0}', space=vmem, size = 0x1000, scoped, tag = 'output window, operand 1, single buffered']
    #allocation7 [shape = 's32[1]{0}', space=sflag, size = 0x4, scoped, tag = 'scoped memory for tpu_custom_call.1']
    #allocation8 [shape = 'u8[4096]{0}', space=vmem, size = 0x1000, scoped, tag = 'output window, operand 2, single buffered']
    %9 = vsyncpa [#allocation3], 0
    %10 = vsyncpa [#allocation4], 0
    %11 = vsyncpa [#allocation7], 0
    // Predicated region
    $region2: #{tpu_custom_call.1} parent=1 // pred_check
      _
    $region3: #{tpu_custom_call.1} parent=1 // pred_check_branch
      %13 = sbr.rel (0) target = $region5
    $region4: #{tpu_custom_call.1} parent=1 // pred_region
      %s15 = ssub.s32 128, 128
      %16 = vsyncadd [#allocation3], %s15
      %s18 = sshll.u32 [#allocation2], 4
      %s19 = int_to_ptr.vmem [resolvable:$true] %s18
      %21 = dma.hbm_to_vmem [thread:$0]  %s0, 128, %s19, [#allocation3]
    $region5: #{tpu_custom_call.1} parent=1 // pred_fallthru
      _
    // Predicated region
    $region6: #{tpu_custom_call.1} parent=1 // pred_check
      _
    $region7: #{tpu_custom_call.1} parent=1 // pred_check_branch
      %23 = sbr.rel (0) target = $region9
    $region8: #{tpu_custom_call.1} parent=1 // pred_region
      %24 = dma.done [#allocation3], 128
    $region9: #{tpu_custom_call.1} parent=1 // pred_fallthru
      _
    %v25 = vld [vmem:[#allocation2] sm:$0xff]
    %v26 = vmax.f32 %v25, 0.0001
    %v27 = vlog2.pop %v26
    %v28 = vmul.f32 %v27, 0.6931472
    %v29 = vmul.f32 %v28, 0.5
    %30 = vst [vmem:[#allocation5] sm:$0xff] %v29
    %v31 = vrot.slane %v29, 4
    %v32 = vmin.f32 %v29, %v31
    %v33 = vrot.slane %v32, 2
    %v34 = vmin.f32 %v32, %v33
    %v35 = vrot.slane %v34, 1
    %v36 = vmin.f32 %v34, %v35
    %37 = vst [vmem:[#allocation6] sm:$0xff] %v36
    %v38 = vrot.slane %v29, 4
    %v39 = vmax.f32 %v29, %v38
    %v40 = vrot.slane %v39, 2
    %v41 = vmax.f32 %v39, %v40
    %v42 = vrot.slane %v41, 1
    %v43 = vmax.f32 %v41, %v42
    %44 = vst [vmem:[#allocation8] sm:$0xff] %v43
    // Predicated region
    $region10: #{tpu_custom_call.1} parent=1 // pred_check
      _
    $region11: #{tpu_custom_call.1} parent=1 // pred_check_branch
      %46 = sbr.rel (0) target = $region13
    $region12: #{tpu_custom_call.1} parent=1 // pred_region
      %s48 = ssub.s32 128, 128
      %49 = vsyncadd [#allocation4], %s48
      %s51 = sshll.u32 [#allocation5], 4
      %s52 = int_to_ptr.vmem [resolvable:$true] %s51
      %54 = dma.vmem_to_hbm [thread:$0]  %s52, 128, %s1, [#allocation4]
    $region13: #{tpu_custom_call.1} parent=1 // pred_fallthru
      _
    // Predicated region
    $region14: #{tpu_custom_call.1} parent=1 // pred_check
      _
    $region15: #{tpu_custom_call.1} parent=1 // pred_check_branch
      %56 = sbr.rel (0) target = $region17
    $region16: #{tpu_custom_call.1} parent=1 // pred_region
      %s58 = ssub.s32 128, 128
      %59 = vsyncadd [#allocation7], %s58
      %s61 = sshll.u32 [#allocation6], 4
      %s62 = int_to_ptr.vmem [resolvable:$true] %s61
      %64 = dma.vmem_to_hbm [thread:$0]  %s62, 128, %s2, [#allocation7]
    $region17: #{tpu_custom_call.1} parent=1 // pred_fallthru
      _
    // Predicated region
    $region18: #{tpu_custom_call.1} parent=1 // pred_check
      _
    $region19: #{tpu_custom_call.1} parent=1 // pred_check_branch
      %66 = sbr.rel (0) target = $region21
    $region20: #{tpu_custom_call.1} parent=1 // pred_region
      %s68 = ssub.s32 128, 128
      %69 = vsyncadd [#allocation7], %s68
      %s71 = sshll.u32 [#allocation8], 4
      %s72 = int_to_ptr.vmem [resolvable:$true] %s71
      %74 = dma.vmem_to_hbm [thread:$0]  %s72, 128, %s3, [#allocation7]
    $region21: #{tpu_custom_call.1} parent=1 // pred_fallthru
      _
    // Predicated region
    $region22: #{tpu_custom_call.1} parent=1 // pred_check
      _
    $region23: #{tpu_custom_call.1} parent=1 // pred_check_branch
      %76 = sbr.rel (0) target = $region25
    $region24: #{tpu_custom_call.1} parent=1 // pred_region
      %77 = dma.done [#allocation4], 128
    $region25: #{tpu_custom_call.1} parent=1 // pred_fallthru
      _
    // Predicated region
    $region26: #{tpu_custom_call.1} parent=1 // pred_check
      _
    $region27: #{tpu_custom_call.1} parent=1 // pred_check_branch
      %79 = sbr.rel (0) target = $region29
    $region28: #{tpu_custom_call.1} parent=1 // pred_region
      %80 = dma.done [#allocation7], 128
    $region29: #{tpu_custom_call.1} parent=1 // pred_fallthru
      _
    // Predicated region
    $region30: #{tpu_custom_call.1} parent=1 // pred_check
      _
    $region31: #{tpu_custom_call.1} parent=1 // pred_check_branch
      %82 = sbr.rel (0) target = $region33
    $region32: #{tpu_custom_call.1} parent=1 // pred_region
      %83 = dma.done [#allocation7], 128
    $region33: #{tpu_custom_call.1} parent=1 // pred_fallthru
      _
    %84 = vsyncpa [#allocation3], 1
    %85 = vsyncpa [#allocation4], 1
    %86 = vsyncpa [#allocation7], 1

</llo_original>
